<compile_context>
chip_gen: v5e
topology: v5e:2x2
jax: 0.10.0
libtpu: 0.0.40
codegen_flags: <defaults>
</compile_context>

<pallas_src>
import jax
import jax.numpy as jnp
import numpy as np
from jax.experimental import pallas as pl
from jax.experimental.pallas import tpu as pltpu


def _bicubic_matrix(in_size: int, scale: int = 2, a: float = -0.75) -> np.ndarray:
    """(scale*in_size, in_size) matrix M such that `up = M @ x` along one axis.

    Matches torch.nn.Upsample(mode='bicubic', align_corners=False): Keys cubic
    kernel with a=-0.75, half-pixel source coordinates, clamped border indices.
    """
    def w1(v):  # |v| <= 1
        return ((a + 2.0) * v - (a + 3.0)) * v * v + 1.0

    def w2(v):  # 1 < |v| < 2
        return ((a * v - 5.0 * a) * v + 8.0 * a) * v - 4.0 * a

    out_size = scale * in_size
    m = np.zeros((out_size, in_size), dtype=np.float64)
    for y in range(out_size):
        src = (y + 0.5) / scale - 0.5
        i0 = int(np.floor(src))
        t = src - i0
        coeffs = (w2(t + 1.0), w1(t), w1(1.0 - t), w2(2.0 - t))
        for k, c in enumerate(coeffs):
            idx = min(max(i0 - 1 + k, 0), in_size - 1)
            m[y, idx] += c
    return m


def upsample_kernel(x_ref, mw_ref, l_ref, o_ref):
    # x_ref : (1, C_in*H, W)      one image; NCHW rows flattened as (c*H + h)
    # mw_ref: (W, 2W)             width bicubic-interp matrix (transposed)
    # l_ref : (C_out*2H, C_in*H)  kron(conv_w, Mh): height interp fused with 1x1 conv
    # o_ref : (1, C_out*2H, 2W)
    x = x_ref[0].astype(jnp.float32)
    t = jnp.dot(x, mw_ref[...], preferred_element_type=jnp.float32)        # (C_in*H, 2W)
    out = jnp.dot(l_ref[...], t, preferred_element_type=jnp.float32)       # (C_out*2H, 2W)
    o_ref[0] = out.astype(o_ref.dtype)


def upsample(x_nchw, conv_w):
    """x_nchw: (N, C_in, H, W); conv_w: (C_out, C_in) 1x1-conv weight (bias=False)."""
    N, C_in, H, W = x_nchw.shape
    C_out = conv_w.shape[0]
    assert conv_w.shape == (C_out, C_in)

    mh_j = jnp.asarray(_bicubic_matrix(H), jnp.float32)        # (2H, H)
    mw_j = jnp.asarray(_bicubic_matrix(W).T, jnp.float32)      # (W, 2W)
    # Fuse height-interp with the channel-mixing 1x1 conv:
    #   L[o*2H + Y, c*H + h] = conv_w[o, c] * Mh[Y, h]
    l_j = jnp.kron(conv_w.astype(jnp.float32), mh_j)           # (C_out*2H, C_in*H)

    x2d = x_nchw.reshape(N, C_in * H, W)                       # free contiguous reshape

    out2d = pl.pallas_call(
        upsample_kernel,
        out_shape=jax.ShapeDtypeStruct((N, C_out * 2 * H, 2 * W), x_nchw.dtype),
        grid_spec=pltpu.PrefetchScalarGridSpec(
            num_scalar_prefetch=0,
            grid=(N,),
            in_specs=[
                pl.BlockSpec((1, C_in * H, W), lambda n: (n, 0, 0)),
                pl.BlockSpec((W, 2 * W), lambda n: (0, 0)),
                pl.BlockSpec((C_out * 2 * H, C_in * H), lambda n: (0, 0)),
            ],
            out_specs=pl.BlockSpec((1, C_out * 2 * H, 2 * W), lambda n: (n, 0, 0)),
        ),
        compiler_params=pltpu.CompilerParams(
            dimension_semantics=("parallel",)),
    )(x2d, mw_j, l_j)

    return out2d.reshape(N, C_out, 2 * H, 2 * W)               # free reshape back to NCHW


def upsample_ref_numpy(x, conv_w, a=-0.75):
    """Independent loop-based reference of PyTorch bicubic-x2 upsample + 1x1 conv."""
    x = np.asarray(x, np.float64)
    conv_w = np.asarray(conv_w, np.float64)
    N, C, H, W = x.shape

    def weights(t):
        def w1(v): return ((a + 2.0) * v - (a + 3.0)) * v * v + 1.0
        def w2(v): return ((a * v - 5.0 * a) * v + 8.0 * a) * v - 4.0 * a
        return (w2(t + 1.0), w1(t), w1(1.0 - t), w2(2.0 - t))

    up = np.zeros((N, C, 2 * H, 2 * W), dtype=np.float64)
    for Y in range(2 * H):
        ry = (Y + 0.5) * 0.5 - 0.5
        iy = int(np.floor(ry))
        cy = weights(ry - iy)
        for X in range(2 * W):
            rx = (X + 0.5) * 0.5 - 0.5
            ix = int(np.floor(rx))
            cx = weights(rx - ix)
            acc = np.zeros((N, C), dtype=np.float64)
            for ky in range(4):
                yy = min(max(iy - 1 + ky, 0), H - 1)
                for kx in range(4):
                    xx = min(max(ix - 1 + kx, 0), W - 1)
                    acc += cy[ky] * cx[kx] * x[:, :, yy, xx]
            up[:, :, Y, X] = acc
    return np.einsum('oc,ncyx->noyx', conv_w, up)


if __name__ == "__main__":
    # UpSample(in_channels=4, out_channels=8) on a (2, 4, 16, 16) input.
    N, C_in, H, W = 2, 4, 16, 16
    C_out = 8

    key = jax.random.PRNGKey(0)
    kx, kw = jax.random.split(key)
    x = jax.random.normal(kx, (N, C_in, H, W), dtype=jnp.float32)
    conv_w = jax.random.normal(kw, (C_out, C_in), dtype=jnp.float32) / jnp.sqrt(C_in)

    out = jax.block_until_ready(upsample(x, conv_w))
    ref = upsample_ref_numpy(np.asarray(x), np.asarray(conv_w))

    assert out.shape == (N, C_out, 2 * H, 2 * W) and out.dtype == x.dtype
    assert np.allclose(np.asarray(out), ref, atol=1e-4, rtol=1e-4), "mismatch vs reference"
    print("KERNEL_OK")
</pallas_src>

<mosaic_0001>
module attributes {stable_mosaic.version = 11 : i64} {
  func.func @upsample_kernel(%arg0: i32, %arg1: memref<1x64x16xf32, #tpu.memory_space<vmem>>, %arg2: memref<16x32xf32, #tpu.memory_space<vmem>>, %arg3: memref<256x64xf32, #tpu.memory_space<vmem>>, %arg4: memref<1x256x32xf32, #tpu.memory_space<vmem>>) attributes {dimension_semantics = [#tpu.dimension_semantics<parallel>], iteration_bounds = array<i64: 2>, scalar_prefetch = 0 : i64, scratch_operands = 0 : i64, tpu.core_type = #tpu.core_type<tc>, window_params = [{transform_indices = @transform_0, window_bounds = array<i64: 1, 64, 16>}, {pipeline_mode = #tpu.pipeline_mode<synchronous>, transform_indices = @transform_1, window_bounds = array<i64: 16, 32>}, {pipeline_mode = #tpu.pipeline_mode<synchronous>, transform_indices = @transform_2, window_bounds = array<i64: 256, 64>}, {transform_indices = @transform_3, window_bounds = array<i64: 1, 256, 32>}]} {
    %c0 = arith.constant 0 : index
    %c0_0 = arith.constant 0 : index
    %c0_1 = arith.constant 0 : index
    %0 = vector.load %arg1[%c0, %c0_0, %c0_1] : memref<1x64x16xf32, #tpu.memory_space<vmem>>, vector<1x64x16xf32>
    %1 = vector.shape_cast %0 : vector<1x64x16xf32> to vector<64x16xf32>
    %c0_2 = arith.constant 0 : index
    %c0_3 = arith.constant 0 : index
    %2 = vector.load %arg2[%c0_2, %c0_3] : memref<16x32xf32, #tpu.memory_space<vmem>>, vector<16x32xf32>
    %cst = arith.constant dense<0.000000e+00> : vector<64x32xf32>
    %3 = tpu.matmul %1, %2, %cst {dimension_numbers = #tpu.dot_dimension_numbers<[1], [0], [0], [1], [0, 0, 1, 1], [], []>} : vector<64x16xf32>, vector<16x32xf32>, vector<64x32xf32> -> vector<64x32xf32>
    %c0_4 = arith.constant 0 : index
    %c0_5 = arith.constant 0 : index
    %4 = vector.load %arg3[%c0_4, %c0_5] : memref<256x64xf32, #tpu.memory_space<vmem>>, vector<256x64xf32>
    %cst_6 = arith.constant dense<0.000000e+00> : vector<256x32xf32>
    %5 = tpu.matmul %4, %3, %cst_6 {dimension_numbers = #tpu.dot_dimension_numbers<[1], [0], [0], [1], [0, 0, 1, 1], [], []>} : vector<256x64xf32>, vector<64x32xf32>, vector<256x32xf32> -> vector<256x32xf32>
    %c0_7 = arith.constant 0 : index
    %c0_8 = arith.constant 0 : index
    %c0_9 = arith.constant 0 : index
    %6 = vector.load %arg4[%c0_7, %c0_8, %c0_9] : memref<1x256x32xf32, #tpu.memory_space<vmem>>, vector<1x256x32xf32>
    %7 = vector.shape_cast %6 : vector<1x256x32xf32> to vector<256x32xf32>
    %8 = vector.shape_cast %5 : vector<256x32xf32> to vector<1x256x32xf32>
    tpu.vector_store %arg4[%c0_7, %c0_8, %c0_9], %8 {strides = array<i32>} : memref<1x256x32xf32, #tpu.memory_space<vmem>>, vector<1x256x32xf32>,
    return
  }
  func.func @transform_0(%arg0: i32) -> (i32, i32, i32) {
    %c0_i32 = arith.constant 0 : i32
    %c0_i32_0 = arith.constant 0 : i32
    %c0_i32_1 = arith.constant 0 : i32
    return %arg0, %c0_i32, %c0_i32_0 : i32, i32, i32
  }
  func.func @transform_1(%arg0: i32) -> (i32, i32) {
    %c0_i32 = arith.constant 0 : i32
    %c0_i32_0 = arith.constant 0 : i32
    %c0_i32_1 = arith.constant 0 : i32
    return %c0_i32, %c0_i32_0 : i32, i32
  }
  func.func @transform_2(%arg0: i32) -> (i32, i32) {
    %c0_i32 = arith.constant 0 : i32
    %c0_i32_0 = arith.constant 0 : i32
    %c0_i32_1 = arith.constant 0 : i32
    return %c0_i32, %c0_i32_0 : i32, i32
  }
  func.func @transform_3(%arg0: i32) -> (i32, i32, i32) {
    %c0_i32 = arith.constant 0 : i32
    %c0_i32_0 = arith.constant 0 : i32
    %c0_i32_1 = arith.constant 0 : i32
    return %arg0, %c0_i32, %c0_i32_0 : i32, i32, i32
  }
}

</mosaic_0001>

<llo_original>
// kernel: tpu_custom_call.1
$region0: #{tpu_custom_call.1}
  #allocation0 [shape = 'u32[]', space=smem, size = 0x4, offset = 0x4, fixed_abs, tag = 'smem constant byte address 0x4 - core index']
  #allocation1 [shape = 'u32[72,128]{1,0:T(1,128)}', space=vmem, size = 0x9000, scoped, tag = 'internal scratch']
  %s0 = inlined_call_operand.vmem [shape: f32[2,64,16], index: 0, kind: input, shape index: {}]
  %s1 = inlined_call_operand.vmem [shape: f32[16,32], index: 1, kind: input, shape index: {}]
  %s2 = inlined_call_operand.vmem [shape: f32[256,64], index: 2, kind: input, shape index: {}]
  %s3 = inlined_call_operand.vmem [shape: f32[2,256,32], index: 3, kind: output, shape index: {}]
  %s4 = sld [smem:[#allocation0]]
  $region45: #{tpu_custom_call.1} parent=0
    _
  %s6 = ssub.s32 1, %s4
  %s7 = scalar_select 0, %s6, %s4
  loop: start=0, step=1, limit=4
  $region2: #{tpu_custom_call.1} parent=0 // loop_pre_header
    _
  $region3: #{tpu_custom_call.1} parent=0 // loop_header
    %s9 = sphi 0, %s13
    %p10 = scmp.ge.s32.totalorder %s9, 4
    %s19 = sphi 0, %s21
    %s22 = sphi 0, %s19
    %s23 = sphi 0, %s22
    %s39 = sphi 0, %s23
    %s43 = sphi 0, %s43
    %s45 = sphi 0, %s43
    %s46 = sphi 0, %s45
    %s60 = sphi 0, %s46
    %s64 = sphi 0, %s64
    %s66 = sphi 0, %s64
    %s67 = sphi 0, %s66
    %s81 = sphi 0, %s67
    %s87 = sphi 0, %s89
    %s90 = sphi 0, %s87
    %s91 = sphi 0, %s90
    %s107 = sphi 0, %s91
  $region4: #{tpu_custom_call.1} parent=0 // loop_header_branch
    %12 = sbr.rel (%p10) target = $region8
  $region5: #{tpu_custom_call.1} parent=0 // loop_body
    %s14 = ssub.s32 %s9, 1
    %s15 = ssub.s32 %s9, 2
    %s16 = sadd.s32 %s9, 1
    %s17 = ssub.s32 %s9, %s16
    %p18 = scmp.eq.s32.totalorder %s17, 0
    %s20 = sadd.s32 %s19, 1
    %s21 = scalar_select %p18, %s19, %s20
    %p24 = pneg %p18
    %p25 = scmp.eq.s32.totalorder %s9, 1
    %p26 = por %p24, %p25
    %p27 = scmp.ne.s32.totalorder %s19, %s22
    %p28 = scmp.eq.s32.totalorder %s9, 0
    %p29 = por %p27, %p28
    %p30 = scmp.ne.s32.totalorder %s19, %s22
    %p31 = scmp.eq.s32.totalorder %s14, 1
    %p32 = por %p30, %p31
    %p33 = scmp.ne.s32.totalorder %s22, %s23
    %p34 = scmp.eq.s32.totalorder %s14, 0
    %p35 = por %p33, %p34
    %p36 = scmp.ne.s32.totalorder %s22, %s23
    %p37 = scmp.eq.s32.totalorder %s15, 1
    %p38 = por %p36, %p37
    %p40 = scmp.ne.s32.totalorder %s23, %s39
    %p41 = scmp.eq.s32.totalorder %s15, 0
    %p42 = por %p40, %p41
    %s44 = sadd.s32 %s43, 1
    %p47 = scmp.eq.s32.totalorder %s9, 1
    %p48 = scmp.ne.s32.totalorder %s43, %s45
    %p49 = scmp.eq.s32.totalorder %s9, 0
    %p50 = por %p48, %p49
    %p51 = scmp.ne.s32.totalorder %s43, %s45
    %p52 = scmp.eq.s32.totalorder %s14, 1
    %p53 = por %p51, %p52
    %p54 = scmp.ne.s32.totalorder %s45, %s46
    %p55 = scmp.eq.s32.totalorder %s14, 0
    %p56 = por %p54, %p55
    %p57 = scmp.ne.s32.totalorder %s45, %s46
    %p58 = scmp.eq.s32.totalorder %s15, 1
    %p59 = por %p57, %p58
    %p61 = scmp.ne.s32.totalorder %s46, %s60
    %p62 = scmp.eq.s32.totalorder %s15, 0
    %p63 = por %p61, %p62
    %s65 = sadd.s32 %s64, 1
    %p68 = scmp.eq.s32.totalorder %s9, 1
    %p69 = scmp.ne.s32.totalorder %s64, %s66
    %p70 = scmp.eq.s32.totalorder %s9, 0
    %p71 = por %p69, %p70
    %p72 = scmp.ne.s32.totalorder %s64, %s66
    %p73 = scmp.eq.s32.totalorder %s14, 1
    %p74 = por %p72, %p73
    %p75 = scmp.ne.s32.totalorder %s66, %s67
    %p76 = scmp.eq.s32.totalorder %s14, 0
    %p77 = por %p75, %p76
    %p78 = scmp.ne.s32.totalorder %s66, %s67
    %p79 = scmp.eq.s32.totalorder %s15, 1
    %p80 = por %p78, %p79
    %p82 = scmp.ne.s32.totalorder %s67, %s81
    %p83 = scmp.eq.s32.totalorder %s15, 0
    %p84 = por %p82, %p83
    %s85 = ssub.s32 %s9, %s16
    %p86 = scmp.eq.s32.totalorder %s85, 0
    %s88 = sadd.s32 %s87, 1
    %s89 = scalar_select %p86, %s87, %s88
    %p92 = pneg %p86
    %p93 = scmp.eq.s32.totalorder %s9, 1
    %p94 = por %p92, %p93
    %p95 = scmp.ne.s32.totalorder %s87, %s90
    %p96 = scmp.eq.s32.totalorder %s9, 0
    %p97 = por %p95, %p96
    %p98 = scmp.ne.s32.totalorder %s87, %s90
    %p99 = scmp.eq.s32.totalorder %s14, 1
    %p100 = por %p98, %p99
    %p101 = scmp.ne.s32.totalorder %s90, %s91
    %p102 = scmp.eq.s32.totalorder %s14, 0
    %p103 = por %p101, %p102
    %p104 = scmp.ne.s32.totalorder %s90, %s91
    %p105 = scmp.eq.s32.totalorder %s15, 1
    %p106 = por %p104, %p105
    %p108 = scmp.ne.s32.totalorder %s91, %s107
    %p109 = scmp.eq.s32.totalorder %s15, 0
    %p110 = por %p108, %p109
    %p111 = scmp.le.s32.totalorder 1, %s9
    %p112 = scmp.lt.s32.totalorder %s9, 3
    %p113 = pnand %p111, %p112
    %p114 = pneg %p113
    // Predicated region
    $region9: #{tpu_custom_call.1} parent=5 // pred_check
      _
    $region10: #{tpu_custom_call.1} parent=5 // pred_check_branch
      %116 = sbr.rel (%p113) target = $region12
    $region11: #{tpu_custom_call.1} parent=5 // pred_region
      %s117 = ssub.s32 %s9, 1
      // Predicated region
      $region13: #{tpu_custom_call.1} parent=11 // pred_check
        %p118 = pneg %p56
      $region14: #{tpu_custom_call.1} parent=11 // pred_check_branch
        %120 = sbr.rel (%p118) target = $region16
      $region15: #{tpu_custom_call.1} parent=11 // pred_region
        _
      $region16: #{tpu_custom_call.1} parent=11 // pred_fallthru
        _
      // Predicated region
      $region17: #{tpu_custom_call.1} parent=11 // pred_check
        %p121 = pneg %p77
      $region18: #{tpu_custom_call.1} parent=11 // pred_check_branch
        %123 = sbr.rel (%p121) target = $region20
      $region19: #{tpu_custom_call.1} parent=11 // pred_region
        _
      $region20: #{tpu_custom_call.1} parent=11 // pred_fallthru
        _
    $region12: #{tpu_custom_call.1} parent=5 // pred_fallthru
      _
    %p124 = scmp.lt.s32.totalorder %s9, 2
    // Predicated region
    $region21: #{tpu_custom_call.1} parent=5 // pred_check
      %p125 = pneg %p124
    $region22: #{tpu_custom_call.1} parent=5 // pred_check_branch
      %127 = sbr.rel (%p125) target = $region24
    $region23: #{tpu_custom_call.1} parent=5 // pred_region
      // Predicated region
      $region25: #{tpu_custom_call.1} parent=23 // pred_check
        %p128 = pneg %p29
      $region26: #{tpu_custom_call.1} parent=23 // pred_check_branch
        %130 = sbr.rel (%p128) target = $region28
      $region27: #{tpu_custom_call.1} parent=23 // pred_region
        %p131 = scmp.lt.s32.totalorder %s9, 1
        %s132 = scalar_select %p131, %s9, 1
        %s133 = smul.addr %s132, 8
        %s134 = smul.addr %s133, 8
        %s135 = scalar_lea.vmem %s0, %s134
      $region28: #{tpu_custom_call.1} parent=23 // pred_fallthru
        _
    $region24: #{tpu_custom_call.1} parent=5 // pred_fallthru
      _
    %p136 = scmp.le.s32.totalorder 1, %s9
    %p137 = scmp.lt.s32.totalorder %s9, 3
    %p138 = pnand %p136, %p137
    %p139 = pneg %p138
    // Predicated region
    $region29: #{tpu_custom_call.1} parent=5 // pred_check
      _
    $region30: #{tpu_custom_call.1} parent=5 // pred_check_branch
      %141 = sbr.rel (%p138) target = $region32
    $region31: #{tpu_custom_call.1} parent=5 // pred_region
      %s142 = ssub.s32 %s9, 1
      %p143 = scmp.lt.s32.totalorder %s14, 1
      %s144 = scalar_select %p143, %s14, 1
      %s145 = smul.addr %s144, 8
      %s146 = smul.addr %s145, 8
      %s147 = scalar_lea.vmem %s0, %s146
      %p148 = pneg %p35
      %p149 = pneg %p32
      %p150 = pneg %p56
      %p151 = pneg %p53
      %p152 = pneg %p77
      %p153 = pneg %p74
      %p154 = pneg %p103
      %p155 = pneg %p100
      %p156 = scmp.lt.s32.totalorder %s14, 1
      %s157 = scalar_select %p156, %s14, 1
      %s158 = smul.addr %s157, 32
      %s159 = smul.addr %s158, 8
      %s160 = scalar_lea.vmem %s3, %s159
      %p161 = scmp.lt.s32.totalorder %s14, 1
      %s162 = scalar_select %p161, %s14, 1
      %s163 = smul.addr %s162, 8
      %s164 = smul.addr %s163, 8
      %s165 = scalar_lea.vmem %s0, %s164
      %p166 = scmp.lt.s32.totalorder %s14, 1
      %s167 = scalar_select %p166, %s14, 1
      %s168 = smul.addr %s167, 32
      %s169 = smul.addr %s168, 8
      %s170 = scalar_lea.vmem %s3, %s169
      %v171 = vld [vmem:[%s165] sm:$0xff]
      %v172 = vld [vmem:[%s165 + $0x8] sm:$0xff]
      %v173 = vld [vmem:[%s165 + $0x10] sm:$0xff]
      %v174 = vld [vmem:[%s165 + $0x18] sm:$0xff]
      %v175 = vld [vmem:[%s165 + $0x20] sm:$0xff]
      %v176 = vld [vmem:[%s165 + $0x28] sm:$0xff]
      %v177 = vld [vmem:[%s165 + $0x30] sm:$0xff]
      %v178 = vld [vmem:[%s165 + $0x38] sm:$0xff]
      %v179 = vld [vmem:[%s1] sm:$0xff]
      %v180 = vld [vmem:[%s1 + $0x8] sm:$0xff]
      %vm181 = vcmask 130048
      %v183 = vsel %vm181, %v171, 0
      %v186 = vsel %vm181, %v172, 0
      %v189 = vsel %vm181, %v173, 0
      %v192 = vsel %vm181, %v174, 0
      %v195 = vsel %vm181, %v175, 0
      %v198 = vsel %vm181, %v176, 0
      %v201 = vsel %vm181, %v177, 0
      %v204 = vsel %vm181, %v178, 0
      %206 = vmatpush.msra.mxu0 0.0
      %207 = vmatpush.msra.mxu0 0.0
      %208 = vmatpush.msra.mxu0 0.0
      %209 = vmatpush.msra.mxu0 0.0
      %210 = vmatpush.msra.mxu0 0.0
      %211 = vmatpush.msra.mxu0 0.0
      %212 = vmatpush.msra.mxu0 0.0
      %213 = vmatpush.msra.mxu0 0.0
      %214 = vmatpush.msra.mxu0 0.0
      %215 = vmatpush.msra.mxu0 0.0
      %216 = vmatpush.msra.mxu0 0.0
      %217 = vmatpush.msra.mxu0 0.0
      %218 = vmatpush.msra.mxu0 0.0
      %219 = vmatpush.msra.mxu0 0.0
      %220 = vmatpush.msra.mxu0 %v180
      %221 = vmatpush.msra.mxu0 %v179
      %222 = vmatmul.f32.gmra.mxu0 %v183
      %v223 = vpop.f32.mrf.mxu0
      %v224 = vadd.f32 0.0, %v223
      %225 = vmatmul.f32.gmra.mxu0 %v186
      %v226 = vpop.f32.mrf.mxu0
      %v227 = vadd.f32 0.0, %v226
      %228 = vmatmul.f32.gmra.mxu0 %v189
      %v229 = vpop.f32.mrf.mxu0
      %v230 = vadd.f32 0.0, %v229
      %231 = vmatmul.f32.gmra.mxu0 %v192
      %v232 = vpop.f32.mrf.mxu0
      %v233 = vadd.f32 0.0, %v232
      %234 = vmatmul.f32.gmra.mxu0 %v195
      %v235 = vpop.f32.mrf.mxu0
      %v236 = vadd.f32 0.0, %v235
      %237 = vmatmul.f32.gmra.mxu0 %v198
      %v238 = vpop.f32.mrf.mxu0
      %v239 = vadd.f32 0.0, %v238
      %240 = vmatmul.f32.gmra.mxu0 %v201
      %v241 = vpop.f32.mrf.mxu0
      %v242 = vadd.f32 0.0, %v241
      %243 = vmatmul.f32.gmra.mxu0 %v204
      %v244 = vpop.f32.mrf.mxu0
      %v245 = vadd.f32 0.0, %v244
      %246 = vdwg.mxu0
      %v247 = vld [vmem:[%s2] sm:$0xff]
      %v248 = vld [vmem:[%s2 + $0x8] sm:$0xff]
      %v249 = vld [vmem:[%s2 + $0x10] sm:$0xff]
      %v250 = vld [vmem:[%s2 + $0x18] sm:$0xff]
      %v251 = vld [vmem:[%s2 + $0x20] sm:$0xff]
      %v252 = vld [vmem:[%s2 + $0x28] sm:$0xff]
      %v253 = vld [vmem:[%s2 + $0x30] sm:$0xff]
      %v254 = vld [vmem:[%s2 + $0x38] sm:$0xff]
      %v255 = vld [vmem:[%s2 + $0x40] sm:$0xff]
      %v256 = vld [vmem:[%s2 + $0x48] sm:$0xff]
      %v257 = vld [vmem:[%s2 + $0x50] sm:$0xff]
      %v258 = vld [vmem:[%s2 + $0x58] sm:$0xff]
      %v259 = vld [vmem:[%s2 + $0x60] sm:$0xff]
      %v260 = vld [vmem:[%s2 + $0x68] sm:$0xff]
      %v261 = vld [vmem:[%s2 + $0x70] sm:$0xff]
      %v262 = vld [vmem:[%s2 + $0x78] sm:$0xff]
      %v263 = vld [vmem:[%s2 + $0x80] sm:$0xff]
      %v264 = vld [vmem:[%s2 + $0x88] sm:$0xff]
      %v265 = vld [vmem:[%s2 + $0x90] sm:$0xff]
      %v266 = vld [vmem:[%s2 + $0x98] sm:$0xff]
      %v267 = vld [vmem:[%s2 + $0xa0] sm:$0xff]
      %v268 = vld [vmem:[%s2 + $0xa8] sm:$0xff]
      %v269 = vld [vmem:[%s2 + $0xb0] sm:$0xff]
      %v270 = vld [vmem:[%s2 + $0xb8] sm:$0xff]
      %v271 = vld [vmem:[%s2 + $0xc0] sm:$0xff]
      %v272 = vld [vmem:[%s2 + $0xc8] sm:$0xff]
      %v273 = vld [vmem:[%s2 + $0xd0] sm:$0xff]
      %v274 = vld [vmem:[%s2 + $0xd8] sm:$0xff]
      %v275 = vld [vmem:[%s2 + $0xe0] sm:$0xff]
      %v276 = vld [vmem:[%s2 + $0xe8] sm:$0xff]
      %v277 = vld [vmem:[%s2 + $0xf0] sm:$0xff]
      %v278 = vld [vmem:[%s2 + $0xf8] sm:$0xff]
      %vm279 = vcmask 523264
      %v281 = vsel %vm279, %v247, 0
      %v284 = vsel %vm279, %v248, 0
      %v287 = vsel %vm279, %v249, 0
      %v290 = vsel %vm279, %v250, 0
      %v293 = vsel %vm279, %v251, 0
      %v296 = vsel %vm279, %v252, 0
      %v299 = vsel %vm279, %v253, 0
      %v302 = vsel %vm279, %v254, 0
      %v305 = vsel %vm279, %v255, 0
      %v308 = vsel %vm279, %v256, 0
      %v311 = vsel %vm279, %v257, 0
      %v314 = vsel %vm279, %v258, 0
      %v317 = vsel %vm279, %v259, 0
      %v320 = vsel %vm279, %v260, 0
      %v323 = vsel %vm279, %v261, 0
      %v326 = vsel %vm279, %v262, 0
      %v329 = vsel %vm279, %v263, 0
      %v332 = vsel %vm279, %v264, 0
      %v335 = vsel %vm279, %v265, 0
      %v338 = vsel %vm279, %v266, 0
      %v341 = vsel %vm279, %v267, 0
      %v344 = vsel %vm279, %v268, 0
      %v347 = vsel %vm279, %v269, 0
      %v350 = vsel %vm279, %v270, 0
      %v353 = vsel %vm279, %v271, 0
      %v356 = vsel %vm279, %v272, 0
      %v359 = vsel %vm279, %v273, 0
      %v362 = vsel %vm279, %v274, 0
      %v365 = vsel %vm279, %v275, 0
      %v368 = vsel %vm279, %v276, 0
      %v371 = vsel %vm279, %v277, 0
      %v374 = vsel %vm279, %v278, 0
      %376 = vmatpush.msra.mxu0 0.0
      %377 = vmatpush.msra.mxu0 0.0
      %378 = vmatpush.msra.mxu0 0.0
      %379 = vmatpush.msra.mxu0 0.0
      %380 = vmatpush.msra.mxu0 0.0
      %381 = vmatpush.msra.mxu0 0.0
      %382 = vmatpush.msra.mxu0 0.0
      %383 = vmatpush.msra.mxu0 0.0
      %384 = vmatpush.msra.mxu0 %v245
      %385 = vmatpush.msra.mxu0 %v242
      %386 = vmatpush.msra.mxu0 %v239
      %387 = vmatpush.msra.mxu0 %v236
      %388 = vmatpush.msra.mxu0 %v233
      %389 = vmatpush.msra.mxu0 %v230
      %390 = vmatpush.msra.mxu0 %v227
      %391 = vmatpush.msra.mxu0 %v224
      %392 = vmatmul.f32.gmra.mxu0 %v281
      %v393 = vpop.f32.mrf.mxu0
      %v394 = vadd.f32 0.0, %v393
      %395 = vmatmul.f32.gmra.mxu0 %v284
      %v396 = vpop.f32.mrf.mxu0
      %v397 = vadd.f32 0.0, %v396
      %398 = vmatmul.f32.gmra.mxu0 %v287
      %v399 = vpop.f32.mrf.mxu0
      %v400 = vadd.f32 0.0, %v399
      %401 = vmatmul.f32.gmra.mxu0 %v290
      %v402 = vpop.f32.mrf.mxu0
      %v403 = vadd.f32 0.0, %v402
      %404 = vmatmul.f32.gmra.mxu0 %v293
      %v405 = vpop.f32.mrf.mxu0
      %v406 = vadd.f32 0.0, %v405
      %407 = vmatmul.f32.gmra.mxu0 %v296
      %v408 = vpop.f32.mrf.mxu0
      %v409 = vadd.f32 0.0, %v408
      %410 = vmatmul.f32.gmra.mxu0 %v299
      %v411 = vpop.f32.mrf.mxu0
      %v412 = vadd.f32 0.0, %v411
      %413 = vmatmul.f32.gmra.mxu0 %v302
      %v414 = vpop.f32.mrf.mxu0
      %v415 = vadd.f32 0.0, %v414
      %416 = vmatmul.f32.gmra.mxu0 %v305
      %v417 = vpop.f32.mrf.mxu0
      %v418 = vadd.f32 0.0, %v417
      %419 = vmatmul.f32.gmra.mxu0 %v308
      %v420 = vpop.f32.mrf.mxu0
      %v421 = vadd.f32 0.0, %v420
      %422 = vmatmul.f32.gmra.mxu0 %v311
      %v423 = vpop.f32.mrf.mxu0
      %v424 = vadd.f32 0.0, %v423
      %425 = vmatmul.f32.gmra.mxu0 %v314
      %v426 = vpop.f32.mrf.mxu0
      %v427 = vadd.f32 0.0, %v426
      %428 = vmatmul.f32.gmra.mxu0 %v317
      %v429 = vpop.f32.mrf.mxu0
      %v430 = vadd.f32 0.0, %v429
      %431 = vmatmul.f32.gmra.mxu0 %v320
      %v432 = vpop.f32.mrf.mxu0
      %v433 = vadd.f32 0.0, %v432
      %434 = vmatmul.f32.gmra.mxu0 %v323
      %v435 = vpop.f32.mrf.mxu0
      %v436 = vadd.f32 0.0, %v435
      %437 = vmatmul.f32.gmra.mxu0 %v326
      %v438 = vpop.f32.mrf.mxu0
      %v439 = vadd.f32 0.0, %v438
      %440 = vmatmul.f32.gmra.mxu0 %v329
      %v441 = vpop.f32.mrf.mxu0
      %v442 = vadd.f32 0.0, %v441
      %443 = vmatmul.f32.gmra.mxu0 %v332
      %v444 = vpop.f32.mrf.mxu0
      %v445 = vadd.f32 0.0, %v444
      %446 = vmatmul.f32.gmra.mxu0 %v335
      %v447 = vpop.f32.mrf.mxu0
      %v448 = vadd.f32 0.0, %v447
      %449 = vmatmul.f32.gmra.mxu0 %v338
      %v450 = vpop.f32.mrf.mxu0
      %v451 = vadd.f32 0.0, %v450
      %452 = vmatmul.f32.gmra.mxu0 %v341
      %v453 = vpop.f32.mrf.mxu0
      %v454 = vadd.f32 0.0, %v453
      %455 = vmatmul.f32.gmra.mxu0 %v344
      %v456 = vpop.f32.mrf.mxu0
      %v457 = vadd.f32 0.0, %v456
      %458 = vmatmul.f32.gmra.mxu0 %v347
      %v459 = vpop.f32.mrf.mxu0
      %v460 = vadd.f32 0.0, %v459
      %461 = vmatmul.f32.gmra.mxu0 %v350
      %v462 = vpop.f32.mrf.mxu0
      %v463 = vadd.f32 0.0, %v462
      %464 = vmatmul.f32.gmra.mxu0 %v353
      %v465 = vpop.f32.mrf.mxu0
      %v466 = vadd.f32 0.0, %v465
      %467 = vmatmul.f32.gmra.mxu0 %v356
      %v468 = vpop.f32.mrf.mxu0
      %v469 = vadd.f32 0.0, %v468
      %470 = vmatmul.f32.gmra.mxu0 %v359
      %v471 = vpop.f32.mrf.mxu0
      %v472 = vadd.f32 0.0, %v471
      %473 = vmatmul.f32.gmra.mxu0 %v362
      %v474 = vpop.f32.mrf.mxu0
      %v475 = vadd.f32 0.0, %v474
      %476 = vmatmul.f32.gmra.mxu0 %v365
      %v477 = vpop.f32.mrf.mxu0
      %v478 = vadd.f32 0.0, %v477
      %479 = vmatmul.f32.gmra.mxu0 %v368
      %v480 = vpop.f32.mrf.mxu0
      %v481 = vadd.f32 0.0, %v480
      %482 = vmatmul.f32.gmra.mxu0 %v371
      %v483 = vpop.f32.mrf.mxu0
      %v484 = vadd.f32 0.0, %v483
      %485 = vmatmul.f32.gmra.mxu0 %v374
      %v486 = vpop.f32.mrf.mxu0
      %v487 = vadd.f32 0.0, %v486
      %488 = vdwg.mxu0
      %vm489 = vcmask 261120
      %490 = vst.msk [vmem:[%s170] sm:$0xff] %vm489, %v394
      %491 = vst.msk [vmem:[%s170 + $0x8] sm:$0xff] %vm489, %v397
      %492 = vst.msk [vmem:[%s170 + $0x10] sm:$0xff] %vm489, %v400
      %493 = vst.msk [vmem:[%s170 + $0x18] sm:$0xff] %vm489, %v403
      %494 = vst.msk [vmem:[%s170 + $0x20] sm:$0xff] %vm489, %v406
      %495 = vst.msk [vmem:[%s170 + $0x28] sm:$0xff] %vm489, %v409
      %496 = vst.msk [vmem:[%s170 + $0x30] sm:$0xff] %vm489, %v412
      %497 = vst.msk [vmem:[%s170 + $0x38] sm:$0xff] %vm489, %v415
      %498 = vst.msk [vmem:[%s170 + $0x40] sm:$0xff] %vm489, %v418
      %499 = vst.msk [vmem:[%s170 + $0x48] sm:$0xff] %vm489, %v421
      %500 = vst.msk [vmem:[%s170 + $0x50] sm:$0xff] %vm489, %v424
      %501 = vst.msk [vmem:[%s170 + $0x58] sm:$0xff] %vm489, %v427
      %502 = vst.msk [vmem:[%s170 + $0x60] sm:$0xff] %vm489, %v430
      %503 = vst.msk [vmem:[%s170 + $0x68] sm:$0xff] %vm489, %v433
      %504 = vst.msk [vmem:[%s170 + $0x70] sm:$0xff] %vm489, %v436
      %505 = vst.msk [vmem:[%s170 + $0x78] sm:$0xff] %vm489, %v439
      %506 = vst.msk [vmem:[%s170 + $0x80] sm:$0xff] %vm489, %v442
      %507 = vst.msk [vmem:[%s170 + $0x88] sm:$0xff] %vm489, %v445
      %508 = vst.msk [vmem:[%s170 + $0x90] sm:$0xff] %vm489, %v448
      %509 = vst.msk [vmem:[%s170 + $0x98] sm:$0xff] %vm489, %v451
      %510 = vst.msk [vmem:[%s170 + $0xa0] sm:$0xff] %vm489, %v454
      %511 = vst.msk [vmem:[%s170 + $0xa8] sm:$0xff] %vm489, %v457
      %512 = vst.msk [vmem:[%s170 + $0xb0] sm:$0xff] %vm489, %v460
      %513 = vst.msk [vmem:[%s170 + $0xb8] sm:$0xff] %vm489, %v463
      %514 = vst.msk [vmem:[%s170 + $0xc0] sm:$0xff] %vm489, %v466
      %515 = vst.msk [vmem:[%s170 + $0xc8] sm:$0xff] %vm489, %v469
      %516 = vst.msk [vmem:[%s170 + $0xd0] sm:$0xff] %vm489, %v472
      %517 = vst.msk [vmem:[%s170 + $0xd8] sm:$0xff] %vm489, %v475
      %518 = vst.msk [vmem:[%s170 + $0xe0] sm:$0xff] %vm489, %v478
      %519 = vst.msk [vmem:[%s170 + $0xe8] sm:$0xff] %vm489, %v481
      %520 = vst.msk [vmem:[%s170 + $0xf0] sm:$0xff] %vm489, %v484
      %521 = vst.msk [vmem:[%s170 + $0xf8] sm:$0xff] %vm489, %v487
      %p522 = scmp.lt.s32.totalorder %s14, 1
      %s523 = scalar_select %p522, %s14, 1
      %s524 = smul.addr %s523, 32
      %s525 = smul.addr %s524, 8
      %s526 = scalar_lea.vmem %s3, %s525
      // Predicated region
      $region33: #{tpu_custom_call.1} parent=31 // pred_check
        %p527 = pneg %p100
      $region34: #{tpu_custom_call.1} parent=31 // pred_check_branch
        %529 = sbr.rel (%p527) target = $region36
      $region35: #{tpu_custom_call.1} parent=31 // pred_region
        _
      $region36: #{tpu_custom_call.1} parent=31 // pred_fallthru
        _
    $region32: #{tpu_custom_call.1} parent=5 // pred_fallthru
      _
    %p530 = scmp.le.s32.totalorder 2, %s9
    // Predicated region
    $region37: #{tpu_custom_call.1} parent=5 // pred_check
      %p531 = pneg %p530
    $region38: #{tpu_custom_call.1} parent=5 // pred_check_branch
      %533 = sbr.rel (%p531) target = $region40
    $region39: #{tpu_custom_call.1} parent=5 // pred_region
      %s534 = ssub.s32 %s9, 2
      // Predicated region
      $region41: #{tpu_custom_call.1} parent=39 // pred_check
        %p535 = pneg %p106
      $region42: #{tpu_custom_call.1} parent=39 // pred_check_branch
        %537 = sbr.rel (%p535) target = $region44
      $region43: #{tpu_custom_call.1} parent=39 // pred_region
        %p538 = scmp.lt.s32.totalorder %s15, 1
        %s539 = scalar_select %p538, %s15, 1
        %s540 = smul.addr %s539, 32
        %s541 = smul.addr %s540, 8
        %s542 = scalar_lea.vmem %s3, %s541
      $region44: #{tpu_custom_call.1} parent=39 // pred_fallthru
        _
    $region40: #{tpu_custom_call.1} parent=5 // pred_fallthru
      _
  $region6: #{tpu_custom_call.1} parent=0 // loop_footer
    %s13 = sadd.s32 1, %s9
  $region7: #{tpu_custom_call.1} parent=0 // loop_footer_branch
    %8 = sbr.rel target = $region3
  $region8: #{tpu_custom_call.1} parent=0 // loop_exit
    _

</llo_original>
